<compile_context>
chip_gen: v5e
topology: v5e:2x2
jax: 0.10.0
libtpu: 0.0.40
codegen_flags: <defaults>
</compile_context>

<pallas_src>
import jax
import jax.numpy as jnp
from jax.experimental import pallas as pl
from jax.experimental.pallas import tpu as pltpu


def lstm_kernel(x_ref, h0_ref, c0_ref, wih_ref, whh_ref, b_ref,
                out_ref, hn_ref, cn_ref):
    """Whole LSTM recurrence in one kernel invocation.

    x_ref:   (B, T*I)  batch-first, flattened: x_ref[:, t*I:(t+1)*I] == x[:, t, :]
    h0_ref:  (B, H),  c0_ref: (B, H)
    wih_ref: (I, 4H)  == W_ih^T,  whh_ref: (H, 4H) == W_hh^T
    b_ref:   (1, 4H)  == b_ih + b_hh
    out_ref: (B, T*H) lane-dense: out_ref[:, t*H:(t+1)*H] == y[:, t, :]
    hn_ref:  (B, H),  cn_ref: (B, H)
    Gate order matches PyTorch: [i, f, g, o] along the 4H axis.
    """
    B, H = h0_ref.shape
    I = wih_ref.shape[0]
    T = x_ref.shape[1] // I

    # Weights / bias loaded once and kept resident across the recurrence.
    wih = wih_ref[...]                                       # (I, 4H)
    whh = whh_ref[...]                                       # (H, 4H)
    bias = b_ref[...]                                        # (1, 4H)
    x = x_ref[...]                                           # (B, T*I)

    # Hoisted input projection: T small (B, I) x (I, 4H) MXU ops, all
    # independent of h -> off the serial critical path.
    gx = [jnp.dot(x[:, t * I:(t + 1) * I], wih,
                  preferred_element_type=jnp.float32) + bias
          for t in range(T)]                                 # T x (B, 4H)

    # Lane mask over the 4H gate axis: the "g" gate occupies lanes [2H, 3H).
    lane = jax.lax.broadcasted_iota(jnp.int32, (B, 4 * H), 1)
    g_lanes = (lane >= 2 * H) & (lane < 3 * H)

    h = h0_ref[...]                                          # (B, H)
    c = c0_ref[...]                                          # (B, H)

    # T is a small static constant -> fully unrolled serial recurrence.
    for t in range(T):
        gates = gx[t] + jnp.dot(h, whh,
                                preferred_element_type=jnp.float32)  # (B, 4H)
        # One EUP pass for the whole tile: tanh(z) = 2*sigmoid(2z) - 1 on the
        # g-gate lanes, plain sigmoid elsewhere.  Pre-scale / fix-up are VPU.
        z = jnp.where(g_lanes, 2.0 * gates, gates)
        s = jax.nn.sigmoid(z)
        act = jnp.where(g_lanes, 2.0 * s - 1.0, s)
        i_g = act[:, 0 * H:1 * H]
        f_g = act[:, 1 * H:2 * H]
        g_g = act[:, 2 * H:3 * H]
        o_g = act[:, 3 * H:4 * H]
        c = f_g * c + i_g * g_g
        h = o_g * jnp.tanh(c)
        # Static lane-subrange store into the lane-dense (B, T*H) output tile
        # (stays in VMEM; the HBM writeback at the end is a dense store).
        out_ref[:, t * H:(t + 1) * H] = h

    # Final states written exactly once.
    hn_ref[...] = h
    cn_ref[...] = c


def lstm_forward(x, hidden, cell, w_ih, w_hh, b_ih, b_hh):
    """Equivalent of `output, (h_n, c_n) = self.lstm(x, (hidden, cell))`.

    x:       (B, T, I) float32, batch_first
    hidden:  (1, B, H), cell: (1, B, H)   (num_layers * num_dirs = 1)
    w_ih:    (4H, I), w_hh: (4H, H), b_ih/b_hh: (4H,)   (PyTorch param shapes)
    Returns: output (B, T, H), (h_n (1, B, H), c_n (1, B, H))
    """
    B, T, I = x.shape
    H = hidden.shape[-1]

    # Free reshapes only on the data path (no transposes, no pads).
    x_flat = x.astype(jnp.float32).reshape(B, T * I)         # (B, T*I)
    h0 = hidden.astype(jnp.float32).reshape(B, H)
    c0 = cell.astype(jnp.float32).reshape(B, H)

    wih_t = jnp.asarray(w_ih, jnp.float32).T                 # (I, 4H)
    whh_t = jnp.asarray(w_hh, jnp.float32).T                 # (H, 4H)
    bias = (jnp.asarray(b_ih, jnp.float32)
            + jnp.asarray(b_hh, jnp.float32)).reshape(1, 4 * H)

    cost = pl.CostEstimate(
        flops=2 * T * B * (I + H) * 4 * H,
        transcendentals=T * B * 5 * H,                       # sigmoid(4H) + tanh(H)
        bytes_accessed=4 * (B * T * I + 2 * B * H + I * 4 * H + H * 4 * H
                            + 4 * H + B * T * H + 2 * B * H),
    )

    out_flat, h_n, c_n = pl.pallas_call(
        lstm_kernel,
        out_shape=(jax.ShapeDtypeStruct((B, T * H), jnp.float32),
                   jax.ShapeDtypeStruct((B, H), jnp.float32),
                   jax.ShapeDtypeStruct((B, H), jnp.float32)),
        grid=(1,),
        in_specs=[
            pl.BlockSpec((B, T * I), lambda i: (0, 0)),      # x (flat, batch-first)
            pl.BlockSpec((B, H), lambda i: (0, 0)),          # h0
            pl.BlockSpec((B, H), lambda i: (0, 0)),          # c0
            pl.BlockSpec((I, 4 * H), lambda i: (0, 0)),      # W_ih^T
            pl.BlockSpec((H, 4 * H), lambda i: (0, 0)),      # W_hh^T
            pl.BlockSpec((1, 4 * H), lambda i: (0, 0)),      # bias
        ],
        out_specs=(
            pl.BlockSpec((B, T * H), lambda i: (0, 0)),      # output (lane-dense)
            pl.BlockSpec((B, H), lambda i: (0, 0)),          # h_n
            pl.BlockSpec((B, H), lambda i: (0, 0)),          # c_n
        ),
        compiler_params=pltpu.CompilerParams(
            # Serial recurrence on one TC. At B=2 a second v7x core has no
            # independent work; add a leading 'parallel' batch-tile axis only
            # if batch grows beyond a couple of sublane groups.
            dimension_semantics=("arbitrary",)),
        cost_estimate=cost,
    )(x_flat, h0, c0, wih_t, whh_t, bias)

    output = out_flat.reshape(B, T, H)                       # free reshape
    return output, (h_n[None], c_n[None])


def _reference_lstm(x, hidden, cell, w_ih, w_hh, b_ih, b_hh):
    """Pure-JAX reference (PyTorch nn.LSTM single-layer semantics)."""
    H = hidden.shape[-1]
    bias = b_ih + b_hh

    def step(carry, x_t):
        h, c = carry
        gates = x_t @ w_ih.T + h @ w_hh.T + bias
        i = jax.nn.sigmoid(gates[:, 0 * H:1 * H])
        f = jax.nn.sigmoid(gates[:, 1 * H:2 * H])
        g = jnp.tanh(gates[:, 2 * H:3 * H])
        o = jax.nn.sigmoid(gates[:, 3 * H:4 * H])
        c_new = f * c + i * g
        h_new = o * jnp.tanh(c_new)
        return (h_new, c_new), h_new

    (h_n, c_n), ys = jax.lax.scan(step, (hidden[0], cell[0]),
                                  jnp.transpose(x, (1, 0, 2)))
    return jnp.transpose(ys, (1, 0, 2)), (h_n[None], c_n[None])


if __name__ == "__main__":
    # Sizes consistent with the module: lstm_input_size=16, lstm_hidden_size=32,
    # lstm_num_layers=1, unidirectional.
    B, T, I, H = 2, 8, 16, 32

    key = jax.random.PRNGKey(0)
    k_x, k_wih, k_whh, k_bih, k_bhh = jax.random.split(key, 5)

    # Deterministic PyTorch-style init: U(-1/sqrt(H), 1/sqrt(H))
    bound = 1.0 / (H ** 0.5)
    x = jax.random.normal(k_x, (B, T, I), dtype=jnp.float32)
    w_ih = jax.random.uniform(k_wih, (4 * H, I), jnp.float32, -bound, bound)
    w_hh = jax.random.uniform(k_whh, (4 * H, H), jnp.float32, -bound, bound)
    b_ih = jax.random.uniform(k_bih, (4 * H,), jnp.float32, -bound, bound)
    b_hh = jax.random.uniform(k_bhh, (4 * H,), jnp.float32, -bound, bound)

    # init_hidden_cell(batch_size): zeros of (num_layers*num_dirs, B, H)
    hidden = jnp.zeros((1, B, H), jnp.float32)
    cell = jnp.zeros((1, B, H), jnp.float32)

    fwd = jax.jit(lstm_forward)
    out, (h_n, c_n) = fwd(x, hidden, cell, w_ih, w_hh, b_ih, b_hh)
    jax.block_until_ready((out, h_n, c_n))

    # Cross-check against a pure-JAX reference of PyTorch LSTM math.
    # (Slightly looser tolerance than exact-tanh: the in-kernel g-gate uses
    #  tanh(z) = 2*sigmoid(2z) - 1, ~1e-6 absolute difference worst case.)
    ref_out, (ref_h, ref_c) = _reference_lstm(x, hidden, cell,
                                              w_ih, w_hh, b_ih, b_hh)
    assert jnp.allclose(out, ref_out, atol=1e-4, rtol=1e-4)
    assert jnp.allclose(h_n, ref_h, atol=1e-4, rtol=1e-4)
    assert jnp.allclose(c_n, ref_c, atol=1e-4, rtol=1e-4)

    # TODO(synk): forward/predict/classify are abstract in ModelAttackerLSTM;
    # only the concrete nn.LSTM compute is implemented here. Dropout is
    # inactive for num_layers=1 (matches the module's constructor).
    print("KERNEL_OK")
</pallas_src>

<mosaic_0001>
module attributes {stable_mosaic.version = 11 : i64} {
  func.func @lstm_kernel(%arg0: i32, %arg1: memref<2x128xf32, #tpu.memory_space<vmem>>, %arg2: memref<2x32xf32, #tpu.memory_space<vmem>>, %arg3: memref<2x32xf32, #tpu.memory_space<vmem>>, %arg4: memref<16x128xf32, #tpu.memory_space<vmem>>, %arg5: memref<32x128xf32, #tpu.memory_space<vmem>>, %arg6: memref<1x128xf32, #tpu.memory_space<vmem>>, %arg7: memref<2x256xf32, #tpu.memory_space<vmem>>, %arg8: memref<2x32xf32, #tpu.memory_space<vmem>>, %arg9: memref<2x32xf32, #tpu.memory_space<vmem>>) attributes {dimension_semantics = [#tpu.dimension_semantics<arbitrary>], iteration_bounds = array<i64: 1>, scalar_prefetch = 0 : i64, scratch_operands = 0 : i64, tpu.core_type = #tpu.core_type<tc>, window_params = [{pipeline_mode = #tpu.pipeline_mode<synchronous>, transform_indices = @transform_0, window_bounds = array<i64: 2, 128>}, {pipeline_mode = #tpu.pipeline_mode<synchronous>, transform_indices = @transform_1, window_bounds = array<i64: 2, 32>}, {pipeline_mode = #tpu.pipeline_mode<synchronous>, transform_indices = @transform_2, window_bounds = array<i64: 2, 32>}, {pipeline_mode = #tpu.pipeline_mode<synchronous>, transform_indices = @transform_3, window_bounds = array<i64: 16, 128>}, {pipeline_mode = #tpu.pipeline_mode<synchronous>, transform_indices = @transform_4, window_bounds = array<i64: 32, 128>}, {pipeline_mode = #tpu.pipeline_mode<synchronous>, transform_indices = @transform_5, window_bounds = array<i64: 1, 128>}, {pipeline_mode = #tpu.pipeline_mode<synchronous>, transform_indices = @transform_6, window_bounds = array<i64: 2, 256>}, {pipeline_mode = #tpu.pipeline_mode<synchronous>, transform_indices = @transform_7, window_bounds = array<i64: 2, 32>}, {pipeline_mode = #tpu.pipeline_mode<synchronous>, transform_indices = @transform_8, window_bounds = array<i64: 2, 32>}]} {
    %c0 = arith.constant 0 : index
    %c0_0 = arith.constant 0 : index
    %0 = vector.load %arg4[%c0, %c0_0] : memref<16x128xf32, #tpu.memory_space<vmem>>, vector<16x128xf32>
    %c0_1 = arith.constant 0 : index
    %c0_2 = arith.constant 0 : index
    %1 = vector.load %arg5[%c0_1, %c0_2] : memref<32x128xf32, #tpu.memory_space<vmem>>, vector<32x128xf32>
    %c0_3 = arith.constant 0 : index
    %c0_4 = arith.constant 0 : index
    %2 = vector.load %arg6[%c0_3, %c0_4] : memref<1x128xf32, #tpu.memory_space<vmem>>, vector<1x128xf32>
    %c0_5 = arith.constant 0 : index
    %c0_6 = arith.constant 0 : index
    %3 = vector.load %arg1[%c0_5, %c0_6] : memref<2x128xf32, #tpu.memory_space<vmem>>, vector<2x128xf32>
    %4 = vector.extract_strided_slice %3 {offsets = [0, 0], sizes = [2, 16], strides = [1, 1]} : vector<2x128xf32> to vector<2x16xf32>
    %cst = arith.constant dense<0.000000e+00> : vector<2x128xf32>
    %5 = tpu.matmul %4, %0, %cst {dimension_numbers = #tpu.dot_dimension_numbers<[1], [0], [0], [1], [0, 0, 1, 1], [], []>} : vector<2x16xf32>, vector<16x128xf32>, vector<2x128xf32> -> vector<2x128xf32>
    %6 = vector.broadcast %2 : vector<1x128xf32> to vector<2x128xf32>
    %7 = arith.addf %5, %6 : vector<2x128xf32>
    %8 = vector.extract_strided_slice %3 {offsets = [0, 16], sizes = [2, 16], strides = [1, 1]} : vector<2x128xf32> to vector<2x16xf32>
    %cst_7 = arith.constant dense<0.000000e+00> : vector<2x128xf32>
    %9 = tpu.matmul %8, %0, %cst_7 {dimension_numbers = #tpu.dot_dimension_numbers<[1], [0], [0], [1], [0, 0, 1, 1], [], []>} : vector<2x16xf32>, vector<16x128xf32>, vector<2x128xf32> -> vector<2x128xf32>
    %10 = vector.broadcast %2 : vector<1x128xf32> to vector<2x128xf32>
    %11 = arith.addf %9, %10 : vector<2x128xf32>
    %12 = vector.extract_strided_slice %3 {offsets = [0, 32], sizes = [2, 16], strides = [1, 1]} : vector<2x128xf32> to vector<2x16xf32>
    %cst_8 = arith.constant dense<0.000000e+00> : vector<2x128xf32>
    %13 = tpu.matmul %12, %0, %cst_8 {dimension_numbers = #tpu.dot_dimension_numbers<[1], [0], [0], [1], [0, 0, 1, 1], [], []>} : vector<2x16xf32>, vector<16x128xf32>, vector<2x128xf32> -> vector<2x128xf32>
    %14 = vector.broadcast %2 : vector<1x128xf32> to vector<2x128xf32>
    %15 = arith.addf %13, %14 : vector<2x128xf32>
    %16 = vector.extract_strided_slice %3 {offsets = [0, 48], sizes = [2, 16], strides = [1, 1]} : vector<2x128xf32> to vector<2x16xf32>
    %cst_9 = arith.constant dense<0.000000e+00> : vector<2x128xf32>
    %17 = tpu.matmul %16, %0, %cst_9 {dimension_numbers = #tpu.dot_dimension_numbers<[1], [0], [0], [1], [0, 0, 1, 1], [], []>} : vector<2x16xf32>, vector<16x128xf32>, vector<2x128xf32> -> vector<2x128xf32>
    %18 = vector.broadcast %2 : vector<1x128xf32> to vector<2x128xf32>
    %19 = arith.addf %17, %18 : vector<2x128xf32>
    %20 = vector.extract_strided_slice %3 {offsets = [0, 64], sizes = [2, 16], strides = [1, 1]} : vector<2x128xf32> to vector<2x16xf32>
    %cst_10 = arith.constant dense<0.000000e+00> : vector<2x128xf32>
    %21 = tpu.matmul %20, %0, %cst_10 {dimension_numbers = #tpu.dot_dimension_numbers<[1], [0], [0], [1], [0, 0, 1, 1], [], []>} : vector<2x16xf32>, vector<16x128xf32>, vector<2x128xf32> -> vector<2x128xf32>
    %22 = vector.broadcast %2 : vector<1x128xf32> to vector<2x128xf32>
    %23 = arith.addf %21, %22 : vector<2x128xf32>
    %24 = vector.extract_strided_slice %3 {offsets = [0, 80], sizes = [2, 16], strides = [1, 1]} : vector<2x128xf32> to vector<2x16xf32>
    %cst_11 = arith.constant dense<0.000000e+00> : vector<2x128xf32>
    %25 = tpu.matmul %24, %0, %cst_11 {dimension_numbers = #tpu.dot_dimension_numbers<[1], [0], [0], [1], [0, 0, 1, 1], [], []>} : vector<2x16xf32>, vector<16x128xf32>, vector<2x128xf32> -> vector<2x128xf32>
    %26 = vector.broadcast %2 : vector<1x128xf32> to vector<2x128xf32>
    %27 = arith.addf %25, %26 : vector<2x128xf32>
    %28 = vector.extract_strided_slice %3 {offsets = [0, 96], sizes = [2, 16], strides = [1, 1]} : vector<2x128xf32> to vector<2x16xf32>
    %cst_12 = arith.constant dense<0.000000e+00> : vector<2x128xf32>
    %29 = tpu.matmul %28, %0, %cst_12 {dimension_numbers = #tpu.dot_dimension_numbers<[1], [0], [0], [1], [0, 0, 1, 1], [], []>} : vector<2x16xf32>, vector<16x128xf32>, vector<2x128xf32> -> vector<2x128xf32>
    %30 = vector.broadcast %2 : vector<1x128xf32> to vector<2x128xf32>
    %31 = arith.addf %29, %30 : vector<2x128xf32>
    %32 = vector.extract_strided_slice %3 {offsets = [0, 112], sizes = [2, 16], strides = [1, 1]} : vector<2x128xf32> to vector<2x16xf32>
    %cst_13 = arith.constant dense<0.000000e+00> : vector<2x128xf32>
    %33 = tpu.matmul %32, %0, %cst_13 {dimension_numbers = #tpu.dot_dimension_numbers<[1], [0], [0], [1], [0, 0, 1, 1], [], []>} : vector<2x16xf32>, vector<16x128xf32>, vector<2x128xf32> -> vector<2x128xf32>
    %34 = vector.broadcast %2 : vector<1x128xf32> to vector<2x128xf32>
    %35 = arith.addf %33, %34 : vector<2x128xf32>
    %36 = tpu.iota {dimensions = array<i32: 1>} : vector<2x128xi32>
    %c64_i32 = arith.constant 64 : i32
    %37 = vector.broadcast %c64_i32 : i32 to vector<2x128xi32>
    %38 = arith.cmpi sge, %36, %37 : vector<2x128xi32>
    %c96_i32 = arith.constant 96 : i32
    %39 = vector.broadcast %c96_i32 : i32 to vector<2x128xi32>
    %40 = arith.cmpi slt, %36, %39 : vector<2x128xi32>
    %41 = arith.andi %38, %40 : vector<2x128xi1>
    %c0_14 = arith.constant 0 : index
    %c0_15 = arith.constant 0 : index
    %42 = vector.load %arg2[%c0_14, %c0_15] : memref<2x32xf32, #tpu.memory_space<vmem>>, vector<2x32xf32>
    %c0_16 = arith.constant 0 : index
    %c0_17 = arith.constant 0 : index
    %43 = vector.load %arg3[%c0_16, %c0_17] : memref<2x32xf32, #tpu.memory_space<vmem>>, vector<2x32xf32>
    %cst_18 = arith.constant dense<0.000000e+00> : vector<2x128xf32>
    %44 = tpu.matmul %42, %1, %cst_18 {dimension_numbers = #tpu.dot_dimension_numbers<[1], [0], [0], [1], [0, 0, 1, 1], [], []>} : vector<2x32xf32>, vector<32x128xf32>, vector<2x128xf32> -> vector<2x128xf32>
    %45 = arith.addf %7, %44 : vector<2x128xf32>
    %cst_19 = arith.constant 2.000000e+00 : f32
    %46 = vector.broadcast %cst_19 : f32 to vector<2x128xf32>
    %47 = arith.mulf %46, %45 : vector<2x128xf32>
    %48 = arith.select %41, %47, %45 : vector<2x128xi1>, vector<2x128xf32>
    %49 = arith.negf %48 : vector<2x128xf32>
    %50 = math.exp %49 : vector<2x128xf32>
    %cst_20 = arith.constant 1.000000e+00 : f32
    %51 = vector.broadcast %cst_20 : f32 to vector<2x128xf32>
    %52 = arith.addf %51, %50 : vector<2x128xf32>
    %53 = arith.divf %51, %52 : vector<2x128xf32>
    %cst_21 = arith.constant 2.000000e+00 : f32
    %54 = vector.broadcast %cst_21 : f32 to vector<2x128xf32>
    %55 = arith.mulf %54, %53 : vector<2x128xf32>
    %cst_22 = arith.constant 1.000000e+00 : f32
    %56 = vector.broadcast %cst_22 : f32 to vector<2x128xf32>
    %57 = arith.subf %55, %56 : vector<2x128xf32>
    %58 = arith.select %41, %57, %53 : vector<2x128xi1>, vector<2x128xf32>
    %59 = vector.extract_strided_slice %58 {offsets = [0, 0], sizes = [2, 32], strides = [1, 1]} : vector<2x128xf32> to vector<2x32xf32>
    %60 = vector.extract_strided_slice %58 {offsets = [0, 32], sizes = [2, 32], strides = [1, 1]} : vector<2x128xf32> to vector<2x32xf32>
    %61 = vector.extract_strided_slice %58 {offsets = [0, 64], sizes = [2, 32], strides = [1, 1]} : vector<2x128xf32> to vector<2x32xf32>
    %62 = vector.extract_strided_slice %58 {offsets = [0, 96], sizes = [2, 32], strides = [1, 1]} : vector<2x128xf32> to vector<2x32xf32>
    %63 = arith.mulf %60, %43 : vector<2x32xf32>
    %64 = arith.mulf %59, %61 : vector<2x32xf32>
    %65 = arith.addf %63, %64 : vector<2x32xf32>
    %66 = math.tanh %65 : vector<2x32xf32>
    %67 = arith.mulf %62, %66 : vector<2x32xf32>
    %c0_23 = arith.constant 0 : index
    %c0_24 = arith.constant 0 : index
    %68 = vector.load %arg7[%c0_23, %c0_24] : memref<2x256xf32, #tpu.memory_space<vmem>>, vector<2x32xf32>
    tpu.vector_store %arg7[%c0_23, %c0_24], %67 {strides = array<i32>} : memref<2x256xf32, #tpu.memory_space<vmem>>, vector<2x32xf32>,
    %cst_25 = arith.constant dense<0.000000e+00> : vector<2x128xf32>
    %69 = tpu.matmul %67, %1, %cst_25 {dimension_numbers = #tpu.dot_dimension_numbers<[1], [0], [0], [1], [0, 0, 1, 1], [], []>} : vector<2x32xf32>, vector<32x128xf32>, vector<2x128xf32> -> vector<2x128xf32>
    %70 = arith.addf %11, %69 : vector<2x128xf32>
    %cst_26 = arith.constant 2.000000e+00 : f32
    %71 = vector.broadcast %cst_26 : f32 to vector<2x128xf32>
    %72 = arith.mulf %71, %70 : vector<2x128xf32>
    %73 = arith.select %41, %72, %70 : vector<2x128xi1>, vector<2x128xf32>
    %74 = arith.negf %73 : vector<2x128xf32>
    %75 = math.exp %74 : vector<2x128xf32>
    %cst_27 = arith.constant 1.000000e+00 : f32
    %76 = vector.broadcast %cst_27 : f32 to vector<2x128xf32>
    %77 = arith.addf %76, %75 : vector<2x128xf32>
    %78 = arith.divf %76, %77 : vector<2x128xf32>
    %cst_28 = arith.constant 2.000000e+00 : f32
    %79 = vector.broadcast %cst_28 : f32 to vector<2x128xf32>
    %80 = arith.mulf %79, %78 : vector<2x128xf32>
    %cst_29 = arith.constant 1.000000e+00 : f32
    %81 = vector.broadcast %cst_29 : f32 to vector<2x128xf32>
    %82 = arith.subf %80, %81 : vector<2x128xf32>
    %83 = arith.select %41, %82, %78 : vector<2x128xi1>, vector<2x128xf32>
    %84 = vector.extract_strided_slice %83 {offsets = [0, 0], sizes = [2, 32], strides = [1, 1]} : vector<2x128xf32> to vector<2x32xf32>
    %85 = vector.extract_strided_slice %83 {offsets = [0, 32], sizes = [2, 32], strides = [1, 1]} : vector<2x128xf32> to vector<2x32xf32>
    %86 = vector.extract_strided_slice %83 {offsets = [0, 64], sizes = [2, 32], strides = [1, 1]} : vector<2x128xf32> to vector<2x32xf32>
    %87 = vector.extract_strided_slice %83 {offsets = [0, 96], sizes = [2, 32], strides = [1, 1]} : vector<2x128xf32> to vector<2x32xf32>
    %88 = arith.mulf %85, %65 : vector<2x32xf32>
    %89 = arith.mulf %84, %86 : vector<2x32xf32>
    %90 = arith.addf %88, %89 : vector<2x32xf32>
    %91 = math.tanh %90 : vector<2x32xf32>
    %92 = arith.mulf %87, %91 : vector<2x32xf32>
    %c0_30 = arith.constant 0 : index
    %c32 = arith.constant 32 : index
    %93 = vector.load %arg7[%c0_30, %c32] : memref<2x256xf32, #tpu.memory_space<vmem>>, vector<2x32xf32>
    tpu.vector_store %arg7[%c0_30, %c32], %92 {strides = array<i32>} : memref<2x256xf32, #tpu.memory_space<vmem>>, vector<2x32xf32>,
    %cst_31 = arith.constant dense<0.000000e+00> : vector<2x128xf32>
    %94 = tpu.matmul %92, %1, %cst_31 {dimension_numbers = #tpu.dot_dimension_numbers<[1], [0], [0], [1], [0, 0, 1, 1], [], []>} : vector<2x32xf32>, vector<32x128xf32>, vector<2x128xf32> -> vector<2x128xf32>
    %95 = arith.addf %15, %94 : vector<2x128xf32>
    %cst_32 = arith.constant 2.000000e+00 : f32
    %96 = vector.broadcast %cst_32 : f32 to vector<2x128xf32>
    %97 = arith.mulf %96, %95 : vector<2x128xf32>
    %98 = arith.select %41, %97, %95 : vector<2x128xi1>, vector<2x128xf32>
    %99 = arith.negf %98 : vector<2x128xf32>
    %100 = math.exp %99 : vector<2x128xf32>
    %cst_33 = arith.constant 1.000000e+00 : f32
    %101 = vector.broadcast %cst_33 : f32 to vector<2x128xf32>
    %102 = arith.addf %101, %100 : vector<2x128xf32>
    %103 = arith.divf %101, %102 : vector<2x128xf32>
    %cst_34 = arith.constant 2.000000e+00 : f32
    %104 = vector.broadcast %cst_34 : f32 to vector<2x128xf32>
    %105 = arith.mulf %104, %103 : vector<2x128xf32>
    %cst_35 = arith.constant 1.000000e+00 : f32
    %106 = vector.broadcast %cst_35 : f32 to vector<2x128xf32>
    %107 = arith.subf %105, %106 : vector<2x128xf32>
    %108 = arith.select %41, %107, %103 : vector<2x128xi1>, vector<2x128xf32>
    %109 = vector.extract_strided_slice %108 {offsets = [0, 0], sizes = [2, 32], strides = [1, 1]} : vector<2x128xf32> to vector<2x32xf32>
    %110 = vector.extract_strided_slice %108 {offsets = [0, 32], sizes = [2, 32], strides = [1, 1]} : vector<2x128xf32> to vector<2x32xf32>
    %111 = vector.extract_strided_slice %108 {offsets = [0, 64], sizes = [2, 32], strides = [1, 1]} : vector<2x128xf32> to vector<2x32xf32>
    %112 = vector.extract_strided_slice %108 {offsets = [0, 96], sizes = [2, 32], strides = [1, 1]} : vector<2x128xf32> to vector<2x32xf32>
    %113 = arith.mulf %110, %90 : vector<2x32xf32>
    %114 = arith.mulf %109, %111 : vector<2x32xf32>
    %115 = arith.addf %113, %114 : vector<2x32xf32>
    %116 = math.tanh %115 : vector<2x32xf32>
    %117 = arith.mulf %112, %116 : vector<2x32xf32>
    %c0_36 = arith.constant 0 : index
    %c64 = arith.constant 64 : index
    %118 = vector.load %arg7[%c0_36, %c64] : memref<2x256xf32, #tpu.memory_space<vmem>>, vector<2x32xf32>
    tpu.vector_store %arg7[%c0_36, %c64], %117 {strides = array<i32>} : memref<2x256xf32, #tpu.memory_space<vmem>>, vector<2x32xf32>,
    %cst_37 = arith.constant dense<0.000000e+00> : vector<2x128xf32>
    %119 = tpu.matmul %117, %1, %cst_37 {dimension_numbers = #tpu.dot_dimension_numbers<[1], [0], [0], [1], [0, 0, 1, 1], [], []>} : vector<2x32xf32>, vector<32x128xf32>, vector<2x128xf32> -> vector<2x128xf32>
    %120 = arith.addf %19, %119 : vector<2x128xf32>
    %cst_38 = arith.constant 2.000000e+00 : f32
    %121 = vector.broadcast %cst_38 : f32 to vector<2x128xf32>
    %122 = arith.mulf %121, %120 : vector<2x128xf32>
    %123 = arith.select %41, %122, %120 : vector<2x128xi1>, vector<2x128xf32>
    %124 = arith.negf %123 : vector<2x128xf32>
    %125 = math.exp %124 : vector<2x128xf32>
    %cst_39 = arith.constant 1.000000e+00 : f32
    %126 = vector.broadcast %cst_39 : f32 to vector<2x128xf32>
    %127 = arith.addf %126, %125 : vector<2x128xf32>
    %128 = arith.divf %126, %127 : vector<2x128xf32>
    %cst_40 = arith.constant 2.000000e+00 : f32
    %129 = vector.broadcast %cst_40 : f32 to vector<2x128xf32>
    %130 = arith.mulf %129, %128 : vector<2x128xf32>
    %cst_41 = arith.constant 1.000000e+00 : f32
    %131 = vector.broadcast %cst_41 : f32 to vector<2x128xf32>
    %132 = arith.subf %130, %131 : vector<2x128xf32>
    %133 = arith.select %41, %132, %128 : vector<2x128xi1>, vector<2x128xf32>
    %134 = vector.extract_strided_slice %133 {offsets = [0, 0], sizes = [2, 32], strides = [1, 1]} : vector<2x128xf32> to vector<2x32xf32>
    %135 = vector.extract_strided_slice %133 {offsets = [0, 32], sizes = [2, 32], strides = [1, 1]} : vector<2x128xf32> to vector<2x32xf32>
    %136 = vector.extract_strided_slice %133 {offsets = [0, 64], sizes = [2, 32], strides = [1, 1]} : vector<2x128xf32> to vector<2x32xf32>
    %137 = vector.extract_strided_slice %133 {offsets = [0, 96], sizes = [2, 32], strides = [1, 1]} : vector<2x128xf32> to vector<2x32xf32>
    %138 = arith.mulf %135, %115 : vector<2x32xf32>
    %139 = arith.mulf %134, %136 : vector<2x32xf32>
    %140 = arith.addf %138, %139 : vector<2x32xf32>
    %141 = math.tanh %140 : vector<2x32xf32>
    %142 = arith.mulf %137, %141 : vector<2x32xf32>
    %c0_42 = arith.constant 0 : index
    %c96 = arith.constant 96 : index
    %143 = vector.load %arg7[%c0_42, %c96] : memref<2x256xf32, #tpu.memory_space<vmem>>, vector<2x32xf32>
    tpu.vector_store %arg7[%c0_42, %c96], %142 {strides = array<i32>} : memref<2x256xf32, #tpu.memory_space<vmem>>, vector<2x32xf32>,
    %cst_43 = arith.constant dense<0.000000e+00> : vector<2x128xf32>
    %144 = tpu.matmul %142, %1, %cst_43 {dimension_numbers = #tpu.dot_dimension_numbers<[1], [0], [0], [1], [0, 0, 1, 1], [], []>} : vector<2x32xf32>, vector<32x128xf32>, vector<2x128xf32> -> vector<2x128xf32>
    %145 = arith.addf %23, %144 : vector<2x128xf32>
    %cst_44 = arith.constant 2.000000e+00 : f32
    %146 = vector.broadcast %cst_44 : f32 to vector<2x128xf32>
    %147 = arith.mulf %146, %145 : vector<2x128xf32>
    %148 = arith.select %41, %147, %145 : vector<2x128xi1>, vector<2x128xf32>
    %149 = arith.negf %148 : vector<2x128xf32>
    %150 = math.exp %149 : vector<2x128xf32>
    %cst_45 = arith.constant 1.000000e+00 : f32
    %151 = vector.broadcast %cst_45 : f32 to vector<2x128xf32>
    %152 = arith.addf %151, %150 : vector<2x128xf32>
    %153 = arith.divf %151, %152 : vector<2x128xf32>
    %cst_46 = arith.constant 2.000000e+00 : f32
    %154 = vector.broadcast %cst_46 : f32 to vector<2x128xf32>
    %155 = arith.mulf %154, %153 : vector<2x128xf32>
    %cst_47 = arith.constant 1.000000e+00 : f32
    %156 = vector.broadcast %cst_47 : f32 to vector<2x128xf32>
    %157 = arith.subf %155, %156 : vector<2x128xf32>
    %158 = arith.select %41, %157, %153 : vector<2x128xi1>, vector<2x128xf32>
    %159 = vector.extract_strided_slice %158 {offsets = [0, 0], sizes = [2, 32], strides = [1, 1]} : vector<2x128xf32> to vector<2x32xf32>
    %160 = vector.extract_strided_slice %158 {offsets = [0, 32], sizes = [2, 32], strides = [1, 1]} : vector<2x128xf32> to vector<2x32xf32>
    %161 = vector.extract_strided_slice %158 {offsets = [0, 64], sizes = [2, 32], strides = [1, 1]} : vector<2x128xf32> to vector<2x32xf32>
    %162 = vector.extract_strided_slice %158 {offsets = [0, 96], sizes = [2, 32], strides = [1, 1]} : vector<2x128xf32> to vector<2x32xf32>
    %163 = arith.mulf %160, %140 : vector<2x32xf32>
    %164 = arith.mulf %159, %161 : vector<2x32xf32>
    %165 = arith.addf %163, %164 : vector<2x32xf32>
    %166 = math.tanh %165 : vector<2x32xf32>
    %167 = arith.mulf %162, %166 : vector<2x32xf32>
    %c0_48 = arith.constant 0 : index
    %c128 = arith.constant 128 : index
    %168 = vector.load %arg7[%c0_48, %c128] : memref<2x256xf32, #tpu.memory_space<vmem>>, vector<2x32xf32>
    tpu.vector_store %arg7[%c0_48, %c128], %167 {strides = array<i32>} : memref<2x256xf32, #tpu.memory_space<vmem>>, vector<2x32xf32>,
    %cst_49 = arith.constant dense<0.000000e+00> : vector<2x128xf32>
    %169 = tpu.matmul %167, %1, %cst_49 {dimension_numbers = #tpu.dot_dimension_numbers<[1], [0], [0], [1], [0, 0, 1, 1], [], []>} : vector<2x32xf32>, vector<32x128xf32>, vector<2x128xf32> -> vector<2x128xf32>
    %170 = arith.addf %27, %169 : vector<2x128xf32>
    %cst_50 = arith.constant 2.000000e+00 : f32
    %171 = vector.broadcast %cst_50 : f32 to vector<2x128xf32>
    %172 = arith.mulf %171, %170 : vector<2x128xf32>
    %173 = arith.select %41, %172, %170 : vector<2x128xi1>, vector<2x128xf32>
    %174 = arith.negf %173 : vector<2x128xf32>
    %175 = math.exp %174 : vector<2x128xf32>
    %cst_51 = arith.constant 1.000000e+00 : f32
    %176 = vector.broadcast %cst_51 : f32 to vector<2x128xf32>
    %177 = arith.addf %176, %175 : vector<2x128xf32>
    %178 = arith.divf %176, %177 : vector<2x128xf32>
    %cst_52 = arith.constant 2.000000e+00 : f32
    %179 = vector.broadcast %cst_52 : f32 to vector<2x128xf32>
    %180 = arith.mulf %179, %178 : vector<2x128xf32>
    %cst_53 = arith.constant 1.000000e+00 : f32
    %181 = vector.broadcast %cst_53 : f32 to vector<2x128xf32>
    %182 = arith.subf %180, %181 : vector<2x128xf32>
    %183 = arith.select %41, %182, %178 : vector<2x128xi1>, vector<2x128xf32>
    %184 = vector.extract_strided_slice %183 {offsets = [0, 0], sizes = [2, 32], strides = [1, 1]} : vector<2x128xf32> to vector<2x32xf32>
    %185 = vector.extract_strided_slice %183 {offsets = [0, 32], sizes = [2, 32], strides = [1, 1]} : vector<2x128xf32> to vector<2x32xf32>
    %186 = vector.extract_strided_slice %183 {offsets = [0, 64], sizes = [2, 32], strides = [1, 1]} : vector<2x128xf32> to vector<2x32xf32>
    %187 = vector.extract_strided_slice %183 {offsets = [0, 96], sizes = [2, 32], strides = [1, 1]} : vector<2x128xf32> to vector<2x32xf32>
    %188 = arith.mulf %185, %165 : vector<2x32xf32>
    %189 = arith.mulf %184, %186 : vector<2x32xf32>
    %190 = arith.addf %188, %189 : vector<2x32xf32>
    %191 = math.tanh %190 : vector<2x32xf32>
    %192 = arith.mulf %187, %191 : vector<2x32xf32>
    %c0_54 = arith.constant 0 : index
    %c160 = arith.constant 160 : index
    %193 = vector.load %arg7[%c0_54, %c160] : memref<2x256xf32, #tpu.memory_space<vmem>>, vector<2x32xf32>
    tpu.vector_store %arg7[%c0_54, %c160], %192 {strides = array<i32>} : memref<2x256xf32, #tpu.memory_space<vmem>>, vector<2x32xf32>,
    %cst_55 = arith.constant dense<0.000000e+00> : vector<2x128xf32>
    %194 = tpu.matmul %192, %1, %cst_55 {dimension_numbers = #tpu.dot_dimension_numbers<[1], [0], [0], [1], [0, 0, 1, 1], [], []>} : vector<2x32xf32>, vector<32x128xf32>, vector<2x128xf32> -> vector<2x128xf32>
    %195 = arith.addf %31, %194 : vector<2x128xf32>
    %cst_56 = arith.constant 2.000000e+00 : f32
    %196 = vector.broadcast %cst_56 : f32 to vector<2x128xf32>
    %197 = arith.mulf %196, %195 : vector<2x128xf32>
    %198 = arith.select %41, %197, %195 : vector<2x128xi1>, vector<2x128xf32>
    %199 = arith.negf %198 : vector<2x128xf32>
    %200 = math.exp %199 : vector<2x128xf32>
    %cst_57 = arith.constant 1.000000e+00 : f32
    %201 = vector.broadcast %cst_57 : f32 to vector<2x128xf32>
    %202 = arith.addf %201, %200 : vector<2x128xf32>
    %203 = arith.divf %201, %202 : vector<2x128xf32>
    %cst_58 = arith.constant 2.000000e+00 : f32
    %204 = vector.broadcast %cst_58 : f32 to vector<2x128xf32>
    %205 = arith.mulf %204, %203 : vector<2x128xf32>
    %cst_59 = arith.constant 1.000000e+00 : f32
    %206 = vector.broadcast %cst_59 : f32 to vector<2x128xf32>
    %207 = arith.subf %205, %206 : vector<2x128xf32>
    %208 = arith.select %41, %207, %203 : vector<2x128xi1>, vector<2x128xf32>
    %209 = vector.extract_strided_slice %208 {offsets = [0, 0], sizes = [2, 32], strides = [1, 1]} : vector<2x128xf32> to vector<2x32xf32>
    %210 = vector.extract_strided_slice %208 {offsets = [0, 32], sizes = [2, 32], strides = [1, 1]} : vector<2x128xf32> to vector<2x32xf32>
    %211 = vector.extract_strided_slice %208 {offsets = [0, 64], sizes = [2, 32], strides = [1, 1]} : vector<2x128xf32> to vector<2x32xf32>
    %212 = vector.extract_strided_slice %208 {offsets = [0, 96], sizes = [2, 32], strides = [1, 1]} : vector<2x128xf32> to vector<2x32xf32>
    %213 = arith.mulf %210, %190 : vector<2x32xf32>
    %214 = arith.mulf %209, %211 : vector<2x32xf32>
    %215 = arith.addf %213, %214 : vector<2x32xf32>
    %216 = math.tanh %215 : vector<2x32xf32>
    %217 = arith.mulf %212, %216 : vector<2x32xf32>
    %c0_60 = arith.constant 0 : index
    %c192 = arith.constant 192 : index
    %218 = vector.load %arg7[%c0_60, %c192] : memref<2x256xf32, #tpu.memory_space<vmem>>, vector<2x32xf32>
    tpu.vector_store %arg7[%c0_60, %c192], %217 {strides = array<i32>} : memref<2x256xf32, #tpu.memory_space<vmem>>, vector<2x32xf32>,
    %cst_61 = arith.constant dense<0.000000e+00> : vector<2x128xf32>
    %219 = tpu.matmul %217, %1, %cst_61 {dimension_numbers = #tpu.dot_dimension_numbers<[1], [0], [0], [1], [0, 0, 1, 1], [], []>} : vector<2x32xf32>, vector<32x128xf32>, vector<2x128xf32> -> vector<2x128xf32>
    %220 = arith.addf %35, %219 : vector<2x128xf32>
    %cst_62 = arith.constant 2.000000e+00 : f32
    %221 = vector.broadcast %cst_62 : f32 to vector<2x128xf32>
    %222 = arith.mulf %221, %220 : vector<2x128xf32>
    %223 = arith.select %41, %222, %220 : vector<2x128xi1>, vector<2x128xf32>
    %224 = arith.negf %223 : vector<2x128xf32>
    %225 = math.exp %224 : vector<2x128xf32>
    %cst_63 = arith.constant 1.000000e+00 : f32
    %226 = vector.broadcast %cst_63 : f32 to vector<2x128xf32>
    %227 = arith.addf %226, %225 : vector<2x128xf32>
    %228 = arith.divf %226, %227 : vector<2x128xf32>
    %cst_64 = arith.constant 2.000000e+00 : f32
    %229 = vector.broadcast %cst_64 : f32 to vector<2x128xf32>
    %230 = arith.mulf %229, %228 : vector<2x128xf32>
    %cst_65 = arith.constant 1.000000e+00 : f32
    %231 = vector.broadcast %cst_65 : f32 to vector<2x128xf32>
    %232 = arith.subf %230, %231 : vector<2x128xf32>
    %233 = arith.select %41, %232, %228 : vector<2x128xi1>, vector<2x128xf32>
    %234 = vector.extract_strided_slice %233 {offsets = [0, 0], sizes = [2, 32], strides = [1, 1]} : vector<2x128xf32> to vector<2x32xf32>
    %235 = vector.extract_strided_slice %233 {offsets = [0, 32], sizes = [2, 32], strides = [1, 1]} : vector<2x128xf32> to vector<2x32xf32>
    %236 = vector.extract_strided_slice %233 {offsets = [0, 64], sizes = [2, 32], strides = [1, 1]} : vector<2x128xf32> to vector<2x32xf32>
    %237 = vector.extract_strided_slice %233 {offsets = [0, 96], sizes = [2, 32], strides = [1, 1]} : vector<2x128xf32> to vector<2x32xf32>
    %238 = arith.mulf %235, %215 : vector<2x32xf32>
    %239 = arith.mulf %234, %236 : vector<2x32xf32>
    %240 = arith.addf %238, %239 : vector<2x32xf32>
    %241 = math.tanh %240 : vector<2x32xf32>
    %242 = arith.mulf %237, %241 : vector<2x32xf32>
    %c0_66 = arith.constant 0 : index
    %c224 = arith.constant 224 : index
    %243 = vector.load %arg7[%c0_66, %c224] : memref<2x256xf32, #tpu.memory_space<vmem>>, vector<2x32xf32>
    tpu.vector_store %arg7[%c0_66, %c224], %242 {strides = array<i32>} : memref<2x256xf32, #tpu.memory_space<vmem>>, vector<2x32xf32>,
    %c0_67 = arith.constant 0 : index
    %c0_68 = arith.constant 0 : index
    %244 = vector.load %arg8[%c0_67, %c0_68] : memref<2x32xf32, #tpu.memory_space<vmem>>, vector<2x32xf32>
    tpu.vector_store %arg8[%c0_67, %c0_68], %242 {strides = array<i32>} : memref<2x32xf32, #tpu.memory_space<vmem>>, vector<2x32xf32>,
    %c0_69 = arith.constant 0 : index
    %c0_70 = arith.constant 0 : index
    %245 = vector.load %arg9[%c0_69, %c0_70] : memref<2x32xf32, #tpu.memory_space<vmem>>, vector<2x32xf32>
    tpu.vector_store %arg9[%c0_69, %c0_70], %240 {strides = array<i32>} : memref<2x32xf32, #tpu.memory_space<vmem>>, vector<2x32xf32>,
    return
  }
  func.func @transform_0(%arg0: i32) -> (i32, i32) {
    %c0_i32 = arith.constant 0 : i32
    %c0_i32_0 = arith.constant 0 : i32
    %c0_i32_1 = arith.constant 0 : i32
    return %c0_i32, %c0_i32_0 : i32, i32
  }
  func.func @transform_1(%arg0: i32) -> (i32, i32) {
    %c0_i32 = arith.constant 0 : i32
    %c0_i32_0 = arith.constant 0 : i32
    %c0_i32_1 = arith.constant 0 : i32
    return %c0_i32, %c0_i32_0 : i32, i32
  }
  func.func @transform_2(%arg0: i32) -> (i32, i32) {
    %c0_i32 = arith.constant 0 : i32
    %c0_i32_0 = arith.constant 0 : i32
    %c0_i32_1 = arith.constant 0 : i32
    return %c0_i32, %c0_i32_0 : i32, i32
  }
  func.func @transform_3(%arg0: i32) -> (i32, i32) {
    %c0_i32 = arith.constant 0 : i32
    %c0_i32_0 = arith.constant 0 : i32
    %c0_i32_1 = arith.constant 0 : i32
    return %c0_i32, %c0_i32_0 : i32, i32
  }
  func.func @transform_4(%arg0: i32) -> (i32, i32) {
    %c0_i32 = arith.constant 0 : i32
    %c0_i32_0 = arith.constant 0 : i32
    %c0_i32_1 = arith.constant 0 : i32
    return %c0_i32, %c0_i32_0 : i32, i32
  }
  func.func @transform_5(%arg0: i32) -> (i32, i32) {
    %c0_i32 = arith.constant 0 : i32
    %c0_i32_0 = arith.constant 0 : i32
    %c0_i32_1 = arith.constant 0 : i32
    return %c0_i32, %c0_i32_0 : i32, i32
  }
  func.func @transform_6(%arg0: i32) -> (i32, i32) {
    %c0_i32 = arith.constant 0 : i32
    %c0_i32_0 = arith.constant 0 : i32
    %c0_i32_1 = arith.constant 0 : i32
    return %c0_i32, %c0_i32_0 : i32, i32
  }
  func.func @transform_7(%arg0: i32) -> (i32, i32) {
    %c0_i32 = arith.constant 0 : i32
    %c0_i32_0 = arith.constant 0 : i32
    %c0_i32_1 = arith.constant 0 : i32
    return %c0_i32, %c0_i32_0 : i32, i32
  }
  func.func @transform_8(%arg0: i32) -> (i32, i32) {
    %c0_i32 = arith.constant 0 : i32
    %c0_i32_0 = arith.constant 0 : i32
    %c0_i32_1 = arith.constant 0 : i32
    return %c0_i32, %c0_i32_0 : i32, i32
  }
}

</mosaic_0001>

<llo_original>
// kernel: lstm_forward.1
$region0: #{lstm_forward.1}
  #allocation0 [shape = 'u32[]', space=smem, size = 0x4, offset = 0x4, fixed_abs, tag = 'smem constant byte address 0x4 - core index']
  #allocation1 [shape = 'u32[72,128]{1,0:T(1,128)}', space=vmem, size = 0x9000, scoped, tag = 'internal scratch']
  %s0 = inlined_call_operand.vmem [shape: f32[2,128], index: 0, kind: input, shape index: {}]
  %s1 = inlined_call_operand.vmem [shape: f32[2,32], index: 1, kind: input, shape index: {}]
  %s2 = inlined_call_operand.vmem [shape: f32[2,32], index: 2, kind: input, shape index: {}]
  %s3 = inlined_call_operand.vmem [shape: f32[16,128], index: 3, kind: input, shape index: {}]
  %s4 = inlined_call_operand.hbm [shape: f32[32,128], index: 4, kind: input, shape index: {}]
  %s5 = inlined_call_operand.vmem [shape: f32[1,128], index: 5, kind: input, shape index: {}]
  %s6 = inlined_call_operand.vmem [shape: f32[2,256], index: 6, kind: output, shape index: {0}]
  %s7 = inlined_call_operand.hbm [shape: f32[2,32], index: 7, kind: output, shape index: {1}]
  %s8 = inlined_call_operand.hbm [shape: f32[2,32], index: 8, kind: output, shape index: {2}]
  %9 = xla_tuple %s6, %s7, %s8
  %s10 = sld [smem:[#allocation0]]
  $region54: #{lstm_forward.1} parent=0
    _
  %s12 = ssub.s32 1, %s10
  %s13 = scalar_select 0, %s12, %s10
  $region1: #{lstm_forward.1} parent=0
    #allocation2 [shape = 'u8[16384]{0}', space=vmem, size = 0x4000, scoped, tag = 'input window, operand 4, single buffered']
    #allocation3 [shape = 's32[1]{0}', space=sflag, size = 0x4, scoped, tag = 'scoped memory for lstm_forward.1']
    #allocation4 [shape = 's32[1]{0}', space=sflag, size = 0x4, scoped, tag = 'scoped memory for lstm_forward.1']
    #allocation5 [shape = 'u8[1024]{0}', space=vmem, size = 0x400, scoped, tag = 'output window, operand 1, single buffered']
    #allocation6 [shape = 'u8[1024]{0}', space=vmem, size = 0x400, scoped, tag = 'output window, operand 2, single buffered']
    #allocation7 [shape = 's32[1]{0}', space=sflag, size = 0x4, scoped, tag = 'scoped memory for lstm_forward.1']
    %14 = vsyncpa [#allocation3], 0
    %15 = vsyncpa [#allocation4], 0
    %16 = vsyncpa [#allocation7], 0
    // Predicated region
    $region2: #{lstm_forward.1} parent=1 // pred_check
      _
    $region3: #{lstm_forward.1} parent=1 // pred_check_branch
      %18 = sbr.rel (0) target = $region5
    $region4: #{lstm_forward.1} parent=1 // pred_region
      _
    $region5: #{lstm_forward.1} parent=1 // pred_fallthru
      _
    // Predicated region
    $region6: #{lstm_forward.1} parent=1 // pred_check
      _
    $region7: #{lstm_forward.1} parent=1 // pred_check_branch
      %20 = sbr.rel (0) target = $region9
    $region8: #{lstm_forward.1} parent=1 // pred_region
      _
    $region9: #{lstm_forward.1} parent=1 // pred_fallthru
      _
    // Predicated region
    $region10: #{lstm_forward.1} parent=1 // pred_check
      _
    $region11: #{lstm_forward.1} parent=1 // pred_check_branch
      %22 = sbr.rel (0) target = $region13
    $region12: #{lstm_forward.1} parent=1 // pred_region
      _
    $region13: #{lstm_forward.1} parent=1 // pred_fallthru
      _
    // Predicated region
    $region14: #{lstm_forward.1} parent=1 // pred_check
      _
    $region15: #{lstm_forward.1} parent=1 // pred_check_branch
      %24 = sbr.rel (0) target = $region17
    $region16: #{lstm_forward.1} parent=1 // pred_region
      _
    $region17: #{lstm_forward.1} parent=1 // pred_fallthru
      _
    // Predicated region
    $region18: #{lstm_forward.1} parent=1 // pred_check
      _
    $region19: #{lstm_forward.1} parent=1 // pred_check_branch
      %26 = sbr.rel (0) target = $region21
    $region20: #{lstm_forward.1} parent=1 // pred_region
      %28 = vsyncadd [#allocation3], 0
      %s29 = sshll.u32 %s4, 4
      %s30 = int_to_ptr.hbm [resolvable:$true] %s29
      %s31 = sshll.u32 [#allocation2], 4
      %s32 = int_to_ptr.vmem [resolvable:$true] %s31
      %37 = dma.hbm_to_vmem [thread:$0]  %s30, 512, %s32, [#allocation3], 128, 128, 8
    $region21: #{lstm_forward.1} parent=1 // pred_fallthru
      _
    // Predicated region
    $region22: #{lstm_forward.1} parent=1 // pred_check
      _
    $region23: #{lstm_forward.1} parent=1 // pred_check_branch
      %39 = sbr.rel (0) target = $region25
    $region24: #{lstm_forward.1} parent=1 // pred_region
      _
    $region25: #{lstm_forward.1} parent=1 // pred_fallthru
      _
    // Predicated region
    $region26: #{lstm_forward.1} parent=1 // pred_check
      _
    $region27: #{lstm_forward.1} parent=1 // pred_check_branch
      %41 = sbr.rel (0) target = $region29
    $region28: #{lstm_forward.1} parent=1 // pred_region
      %43 = dma.done [#allocation3], 512
    $region29: #{lstm_forward.1} parent=1 // pred_fallthru
      _
    %v44 = vld [vmem:[%s3] sm:$0xff]
    %v45 = vld [vmem:[%s3 + $0x8] sm:$0xff]
    %v46 = vld [vmem:[#allocation2] sm:$0xff]
    %v47 = vld [vmem:[#allocation2 + $0x8] sm:$0xff]
    %v48 = vld [vmem:[#allocation2 + $0x10] sm:$0xff]
    %v49 = vld [vmem:[#allocation2 + $0x18] sm:$0xff]
    %v50 = vld [vmem:[%s5] sm:$0x1]
    %v51 = vld [vmem:[%s0] sm:$0x3]
    %v53 = vperm.slane %v50, 0
    %vm55 = vcmask 130048
    %v57 = vsel %vm55, %v51, 0
    %59 = vmatpush.msra.mxu0 0.0
    %60 = vmatpush.msra.mxu0 0.0
    %61 = vmatpush.msra.mxu0 0.0
    %62 = vmatpush.msra.mxu0 0.0
    %63 = vmatpush.msra.mxu0 0.0
    %64 = vmatpush.msra.mxu0 0.0
    %65 = vmatpush.msra.mxu0 0.0
    %66 = vmatpush.msra.mxu0 0.0
    %67 = vmatpush.msra.mxu0 0.0
    %68 = vmatpush.msra.mxu0 0.0
    %69 = vmatpush.msra.mxu0 0.0
    %70 = vmatpush.msra.mxu0 0.0
    %71 = vmatpush.msra.mxu0 0.0
    %72 = vmatpush.msra.mxu0 0.0
    %73 = vmatpush.msra.mxu0 %v45
    %74 = vmatpush.msra.mxu0 %v44
    %75 = vmatmul.f32.gmra.mxu0 %v57
    %v76 = vpop.f32.mrf.mxu0
    %v77 = vadd.f32 %v53, %v76
    %78 = vdwg.mxu0
    %79 = vrot.lane.b32.xlu0 %v51, 112
    %v80 = vpop.permute.xlu0 %79
    %v81 = vsel %vm55, %v80, 0
    %83 = vmatpush.msra.mxu0 0.0
    %84 = vmatpush.msra.mxu0 0.0
    %85 = vmatpush.msra.mxu0 0.0
    %86 = vmatpush.msra.mxu0 0.0
    %87 = vmatpush.msra.mxu0 0.0
    %88 = vmatpush.msra.mxu0 0.0
    %89 = vmatpush.msra.mxu0 0.0
    %90 = vmatpush.msra.mxu0 0.0
    %91 = vmatpush.msra.mxu0 0.0
    %92 = vmatpush.msra.mxu0 0.0
    %93 = vmatpush.msra.mxu0 0.0
    %94 = vmatpush.msra.mxu0 0.0
    %95 = vmatpush.msra.mxu0 0.0
    %96 = vmatpush.msra.mxu0 0.0
    %97 = vmatpush.msra.mxu0 %v45
    %98 = vmatpush.msra.mxu0 %v44
    %99 = vmatmul.f32.gmra.mxu0 %v81
    %v100 = vpop.f32.mrf.mxu0
    %v101 = vadd.f32 %v53, %v100
    %102 = vdwg.mxu0
    %103 = vrot.lane.b32.xlu0 %v51, 96
    %v104 = vpop.permute.xlu0 %103
    %v105 = vsel %vm55, %v104, 0
    %107 = vmatpush.msra.mxu0 0.0
    %108 = vmatpush.msra.mxu0 0.0
    %109 = vmatpush.msra.mxu0 0.0
    %110 = vmatpush.msra.mxu0 0.0
    %111 = vmatpush.msra.mxu0 0.0
    %112 = vmatpush.msra.mxu0 0.0
    %113 = vmatpush.msra.mxu0 0.0
    %114 = vmatpush.msra.mxu0 0.0
    %115 = vmatpush.msra.mxu0 0.0
    %116 = vmatpush.msra.mxu0 0.0
    %117 = vmatpush.msra.mxu0 0.0
    %118 = vmatpush.msra.mxu0 0.0
    %119 = vmatpush.msra.mxu0 0.0
    %120 = vmatpush.msra.mxu0 0.0
    %121 = vmatpush.msra.mxu0 %v45
    %122 = vmatpush.msra.mxu0 %v44
    %123 = vmatmul.f32.gmra.mxu0 %v105
    %v124 = vpop.f32.mrf.mxu0
    %v125 = vadd.f32 %v53, %v124
    %126 = vdwg.mxu0
    %127 = vrot.lane.b32.xlu0 %v51, 80
    %v128 = vpop.permute.xlu0 %127
    %v129 = vsel %vm55, %v128, 0
    %131 = vmatpush.msra.mxu0 0.0
    %132 = vmatpush.msra.mxu0 0.0
    %133 = vmatpush.msra.mxu0 0.0
    %134 = vmatpush.msra.mxu0 0.0
    %135 = vmatpush.msra.mxu0 0.0
    %136 = vmatpush.msra.mxu0 0.0
    %137 = vmatpush.msra.mxu0 0.0
    %138 = vmatpush.msra.mxu0 0.0
    %139 = vmatpush.msra.mxu0 0.0
    %140 = vmatpush.msra.mxu0 0.0
    %141 = vmatpush.msra.mxu0 0.0
    %142 = vmatpush.msra.mxu0 0.0
    %143 = vmatpush.msra.mxu0 0.0
    %144 = vmatpush.msra.mxu0 0.0
    %145 = vmatpush.msra.mxu0 %v45
    %146 = vmatpush.msra.mxu0 %v44
    %147 = vmatmul.f32.gmra.mxu0 %v129
    %v148 = vpop.f32.mrf.mxu0
    %v149 = vadd.f32 %v53, %v148
    %150 = vdwg.mxu0
    %151 = vrot.lane.b32.xlu0 %v51, 64
    %v152 = vpop.permute.xlu0 %151
    %v153 = vsel %vm55, %v152, 0
    %155 = vmatpush.msra.mxu0 0.0
    %156 = vmatpush.msra.mxu0 0.0
    %157 = vmatpush.msra.mxu0 0.0
    %158 = vmatpush.msra.mxu0 0.0
    %159 = vmatpush.msra.mxu0 0.0
    %160 = vmatpush.msra.mxu0 0.0
    %161 = vmatpush.msra.mxu0 0.0
    %162 = vmatpush.msra.mxu0 0.0
    %163 = vmatpush.msra.mxu0 0.0
    %164 = vmatpush.msra.mxu0 0.0
    %165 = vmatpush.msra.mxu0 0.0
    %166 = vmatpush.msra.mxu0 0.0
    %167 = vmatpush.msra.mxu0 0.0
    %168 = vmatpush.msra.mxu0 0.0
    %169 = vmatpush.msra.mxu0 %v45
    %170 = vmatpush.msra.mxu0 %v44
    %171 = vmatmul.f32.gmra.mxu0 %v153
    %v172 = vpop.f32.mrf.mxu0
    %v173 = vadd.f32 %v53, %v172
    %174 = vdwg.mxu0
    %175 = vrot.lane.b32.xlu0 %v51, 48
    %v176 = vpop.permute.xlu0 %175
    %v177 = vsel %vm55, %v176, 0
    %179 = vmatpush.msra.mxu0 0.0
    %180 = vmatpush.msra.mxu0 0.0
    %181 = vmatpush.msra.mxu0 0.0
    %182 = vmatpush.msra.mxu0 0.0
    %183 = vmatpush.msra.mxu0 0.0
    %184 = vmatpush.msra.mxu0 0.0
    %185 = vmatpush.msra.mxu0 0.0
    %186 = vmatpush.msra.mxu0 0.0
    %187 = vmatpush.msra.mxu0 0.0
    %188 = vmatpush.msra.mxu0 0.0
    %189 = vmatpush.msra.mxu0 0.0
    %190 = vmatpush.msra.mxu0 0.0
    %191 = vmatpush.msra.mxu0 0.0
    %192 = vmatpush.msra.mxu0 0.0
    %193 = vmatpush.msra.mxu0 %v45
    %194 = vmatpush.msra.mxu0 %v44
    %195 = vmatmul.f32.gmra.mxu0 %v177
    %v196 = vpop.f32.mrf.mxu0
    %v197 = vadd.f32 %v53, %v196
    %198 = vdwg.mxu0
    %199 = vrot.lane.b32.xlu0 %v51, 32
    %v200 = vpop.permute.xlu0 %199
    %v201 = vsel %vm55, %v200, 0
    %203 = vmatpush.msra.mxu0 0.0
    %204 = vmatpush.msra.mxu0 0.0
    %205 = vmatpush.msra.mxu0 0.0
    %206 = vmatpush.msra.mxu0 0.0
    %207 = vmatpush.msra.mxu0 0.0
    %208 = vmatpush.msra.mxu0 0.0
    %209 = vmatpush.msra.mxu0 0.0
    %210 = vmatpush.msra.mxu0 0.0
    %211 = vmatpush.msra.mxu0 0.0
    %212 = vmatpush.msra.mxu0 0.0
    %213 = vmatpush.msra.mxu0 0.0
    %214 = vmatpush.msra.mxu0 0.0
    %215 = vmatpush.msra.mxu0 0.0
    %216 = vmatpush.msra.mxu0 0.0
    %217 = vmatpush.msra.mxu0 %v45
    %218 = vmatpush.msra.mxu0 %v44
    %219 = vmatmul.f32.gmra.mxu0 %v201
    %v220 = vpop.f32.mrf.mxu0
    %v221 = vadd.f32 %v53, %v220
    %222 = vdwg.mxu0
    %223 = vrot.lane.b32.xlu0 %v51, 16
    %v224 = vpop.permute.xlu0 %223
    %v225 = vsel %vm55, %v224, 0
    %227 = vmatpush.msra.mxu0 0.0
    %228 = vmatpush.msra.mxu0 0.0
    %229 = vmatpush.msra.mxu0 0.0
    %230 = vmatpush.msra.mxu0 0.0
    %231 = vmatpush.msra.mxu0 0.0
    %232 = vmatpush.msra.mxu0 0.0
    %233 = vmatpush.msra.mxu0 0.0
    %234 = vmatpush.msra.mxu0 0.0
    %235 = vmatpush.msra.mxu0 0.0
    %236 = vmatpush.msra.mxu0 0.0
    %237 = vmatpush.msra.mxu0 0.0
    %238 = vmatpush.msra.mxu0 0.0
    %239 = vmatpush.msra.mxu0 0.0
    %240 = vmatpush.msra.mxu0 0.0
    %241 = vmatpush.msra.mxu0 %v45
    %242 = vmatpush.msra.mxu0 %v44
    %243 = vmatmul.f32.gmra.mxu0 %v225
    %v244 = vpop.f32.mrf.mxu0
    %v245 = vadd.f32 %v53, %v244
    %246 = vdwg.mxu0
    %v247 = vlaneseq
    %v248 = vand.u32 %v247, 127
    %vm249 = vcmp.ge.s32.totalorder %v248, 64
    %vm250 = vcmp.lt.s32.totalorder %v248, 96
    %vm251 = vmand %vm249, %vm250
    %v252 = vld [vmem:[%s1] sm:$0x3]
    %v253 = vld [vmem:[%s2] sm:$0x3]
    %vm254 = vcmask 261120
    %v256 = vsel %vm254, %v252, 0
    %258 = vmatpush.msra.mxu0 0.0
    %259 = vmatpush.msra.mxu0 0.0
    %260 = vmatpush.msra.mxu0 0.0
    %261 = vmatpush.msra.mxu0 0.0
    %262 = vmatpush.msra.mxu0 0.0
    %263 = vmatpush.msra.mxu0 0.0
    %264 = vmatpush.msra.mxu0 0.0
    %265 = vmatpush.msra.mxu0 0.0
    %266 = vmatpush.msra.mxu0 0.0
    %267 = vmatpush.msra.mxu0 0.0
    %268 = vmatpush.msra.mxu0 0.0
    %269 = vmatpush.msra.mxu0 0.0
    %270 = vmatpush.msra.mxu0 %v49
    %271 = vmatpush.msra.mxu0 %v48
    %272 = vmatpush.msra.mxu0 %v47
    %273 = vmatpush.msra.mxu0 %v46
    %274 = vmatmul.f32.gmra.mxu0 %v256
    %v275 = vpop.f32.mrf.mxu0
    %v276 = vadd.f32 0.0, %v275
    %277 = vdwg.mxu0
    %v278 = vadd.f32 %v77, %v276
    %v279 = vmul.f32 %v278, 2.0
    %v280 = vsel %vm251, %v279, %v278
    %v281 = vxor.u32 %v280, 2147483648
    %v282 = vmul.f32 %v281, 1.442695
    %v283 = vpow.pop %v282
    %v284 = vadd.f32 %v283, 1.0
    %v285 = vrcp.pop %v284
    %v286 = vmul.f32 %v284, %v285
    %v287 = vsub.f32 1.0, %v286
    %v288 = vmul.f32 %v285, %v287
    %v289 = vadd.f32 %v285, %v288
    %vm290 = vweird.f32 %v284
    %vm291 = vweird.f32 %v285
    %vm292 = vmor %vm290, %vm291
    %v293 = vsel %vm292, %v285, %v289
    %v294 = vand.u32 2147483647, %v284
    %vm295 = vcmp.eq.f32.partialorder %v294, 8.507059e+37
    %v296 = vand.u32 %v284, 2147483648
    %v297 = vor.u32 1.1754944e-38, %v296
    %v298 = vsel %vm295, %v297, %v293
    %v299 = vmul.f32 1.0, %v298
    %v300 = vmul.f32 %v299, 2.0
    %v301 = vsub.f32 %v300, 1.0
    %v302 = vsel %vm251, %v301, %v299
    %304 = vrot.lane.b32.xlu0 %v253, 32
    %v305 = vpop.permute.xlu0 %304
    %v307 = vmul.f32 %v302, %v305
    %309 = vrot.lane.b32.xlu0 %v302, 64
    %v310 = vpop.permute.xlu0 %309
    %v312 = vmul.f32 %v302, %v310
    %314 = vrot.lane.b32.xlu0 %v312, 32
    %v315 = vpop.permute.xlu0 %314
    %v317 = vadd.f32 %v307, %v315
    %v318 = vtanh.pop %v317
    %320 = vrot.lane.b32.xlu0 %v318, 64
    %v321 = vpop.permute.xlu0 %320
    %v323 = vmul.f32 %v302, %v321
    %325 = vrot.lane.b32.xlu0 %v323, 32
    %v326 = vpop.permute.xlu0 %325
    %vm328 = vcmask 254976
    %329 = vst.msk [vmem:[%s6] sm:$0x3] %vm328, %v326
    %v330 = vsel %vm254, %v326, 0
    %332 = vmatpush.msra.mxu0 0.0
    %333 = vmatpush.msra.mxu0 0.0
    %334 = vmatpush.msra.mxu0 0.0
    %335 = vmatpush.msra.mxu0 0.0
    %336 = vmatpush.msra.mxu0 0.0
    %337 = vmatpush.msra.mxu0 0.0
    %338 = vmatpush.msra.mxu0 0.0
    %339 = vmatpush.msra.mxu0 0.0
    %340 = vmatpush.msra.mxu0 0.0
    %341 = vmatpush.msra.mxu0 0.0
    %342 = vmatpush.msra.mxu0 0.0
    %343 = vmatpush.msra.mxu0 0.0
    %344 = vmatpush.msra.mxu0 %v49
    %345 = vmatpush.msra.mxu0 %v48
    %346 = vmatpush.msra.mxu0 %v47
    %347 = vmatpush.msra.mxu0 %v46
    %348 = vmatmul.f32.gmra.mxu0 %v330
    %v349 = vpop.f32.mrf.mxu0
    %v350 = vadd.f32 0.0, %v349
    %351 = vdwg.mxu0
    %v352 = vadd.f32 %v101, %v350
    %v353 = vmul.f32 %v352, 2.0
    %v354 = vsel %vm251, %v353, %v352
    %v355 = vxor.u32 %v354, 2147483648
    %v356 = vmul.f32 %v355, 1.442695
    %v357 = vpow.pop %v356
    %v358 = vadd.f32 %v357, 1.0
    %v359 = vrcp.pop %v358
    %v360 = vmul.f32 %v358, %v359
    %v361 = vsub.f32 1.0, %v360
    %v362 = vmul.f32 %v359, %v361
    %v363 = vadd.f32 %v359, %v362
    %vm364 = vweird.f32 %v358
    %vm365 = vweird.f32 %v359
    %vm366 = vmor %vm364, %vm365
    %v367 = vsel %vm366, %v359, %v363
    %v368 = vand.u32 2147483647, %v358
    %vm369 = vcmp.eq.f32.partialorder %v368, 8.507059e+37
    %v370 = vand.u32 %v358, 2147483648
    %v371 = vor.u32 1.1754944e-38, %v370
    %v372 = vsel %vm369, %v371, %v367
    %v373 = vmul.f32 1.0, %v372
    %v374 = vmul.f32 %v373, 2.0
    %v375 = vsub.f32 %v374, 1.0
    %v376 = vsel %vm251, %v375, %v373
    %v377 = vmul.f32 %v376, %v317
    %379 = vrot.lane.b32.xlu0 %v376, 64
    %v380 = vpop.permute.xlu0 %379
    %v382 = vmul.f32 %v376, %v380
    %384 = vrot.lane.b32.xlu0 %v382, 32
    %v385 = vpop.permute.xlu0 %384
    %v387 = vadd.f32 %v377, %v385
    %v388 = vtanh.pop %v387
    %390 = vrot.lane.b32.xlu0 %v388, 64
    %v391 = vpop.permute.xlu0 %390
    %v393 = vmul.f32 %v376, %v391
    %395 = vrot.lane.b32.xlu0 %v393, 64
    %v396 = vpop.permute.xlu0 %395
    %vm398 = vcmask 517376
    %399 = vst.msk [vmem:[%s6] sm:$0x3] %vm398, %v396
    %400 = vrot.lane.b32.xlu0 %v393, 32
    %v401 = vpop.permute.xlu0 %400
    %v402 = vsel %vm254, %v401, 0
    %404 = vmatpush.msra.mxu0 0.0
    %405 = vmatpush.msra.mxu0 0.0
    %406 = vmatpush.msra.mxu0 0.0
    %407 = vmatpush.msra.mxu0 0.0
    %408 = vmatpush.msra.mxu0 0.0
    %409 = vmatpush.msra.mxu0 0.0
    %410 = vmatpush.msra.mxu0 0.0
    %411 = vmatpush.msra.mxu0 0.0
    %412 = vmatpush.msra.mxu0 0.0
    %413 = vmatpush.msra.mxu0 0.0
    %414 = vmatpush.msra.mxu0 0.0
    %415 = vmatpush.msra.mxu0 0.0
    %416 = vmatpush.msra.mxu0 %v49
    %417 = vmatpush.msra.mxu0 %v48
    %418 = vmatpush.msra.mxu0 %v47
    %419 = vmatpush.msra.mxu0 %v46
    %420 = vmatmul.f32.gmra.mxu0 %v402
    %v421 = vpop.f32.mrf.mxu0
    %v422 = vadd.f32 0.0, %v421
    %423 = vdwg.mxu0
    %v424 = vadd.f32 %v125, %v422
    %v425 = vmul.f32 %v424, 2.0
    %v426 = vsel %vm251, %v425, %v424
    %v427 = vxor.u32 %v426, 2147483648
    %v428 = vmul.f32 %v427, 1.442695
    %v429 = vpow.pop %v428
    %v430 = vadd.f32 %v429, 1.0
    %v431 = vrcp.pop %v430
    %v432 = vmul.f32 %v430, %v431
    %v433 = vsub.f32 1.0, %v432
    %v434 = vmul.f32 %v431, %v433
    %v435 = vadd.f32 %v431, %v434
    %vm436 = vweird.f32 %v430
    %vm437 = vweird.f32 %v431
    %vm438 = vmor %vm436, %vm437
    %v439 = vsel %vm438, %v431, %v435
    %v440 = vand.u32 2147483647, %v430
    %vm441 = vcmp.eq.f32.partialorder %v440, 8.507059e+37
    %v442 = vand.u32 %v430, 2147483648
    %v443 = vor.u32 1.1754944e-38, %v442
    %v444 = vsel %vm441, %v443, %v439
    %v445 = vmul.f32 1.0, %v444
    %v446 = vmul.f32 %v445, 2.0
    %v447 = vsub.f32 %v446, 1.0
    %v448 = vsel %vm251, %v447, %v445
    %v449 = vmul.f32 %v448, %v387
    %451 = vrot.lane.b32.xlu0 %v448, 64
    %v452 = vpop.permute.xlu0 %451
    %v454 = vmul.f32 %v448, %v452
    %456 = vrot.lane.b32.xlu0 %v454, 32
    %v457 = vpop.permute.xlu0 %456
    %v459 = vadd.f32 %v449, %v457
    %v460 = vtanh.pop %v459
    %462 = vrot.lane.b32.xlu0 %v460, 64
    %v463 = vpop.permute.xlu0 %462
    %v465 = vmul.f32 %v448, %v463
    %467 = vrot.lane.b32.xlu0 %v465, 96
    %v468 = vpop.permute.xlu0 %467
    %vm470 = vcmask 779776
    %471 = vst.msk [vmem:[%s6] sm:$0x3] %vm470, %v468
    %472 = vrot.lane.b32.xlu0 %v465, 32
    %v473 = vpop.permute.xlu0 %472
    %v474 = vsel %vm254, %v473, 0
    %476 = vmatpush.msra.mxu0 0.0
    %477 = vmatpush.msra.mxu0 0.0
    %478 = vmatpush.msra.mxu0 0.0
    %479 = vmatpush.msra.mxu0 0.0
    %480 = vmatpush.msra.mxu0 0.0
    %481 = vmatpush.msra.mxu0 0.0
    %482 = vmatpush.msra.mxu0 0.0
    %483 = vmatpush.msra.mxu0 0.0
    %484 = vmatpush.msra.mxu0 0.0
    %485 = vmatpush.msra.mxu0 0.0
    %486 = vmatpush.msra.mxu0 0.0
    %487 = vmatpush.msra.mxu0 0.0
    %488 = vmatpush.msra.mxu0 %v49
    %489 = vmatpush.msra.mxu0 %v48
    %490 = vmatpush.msra.mxu0 %v47
    %491 = vmatpush.msra.mxu0 %v46
    %492 = vmatmul.f32.gmra.mxu0 %v474
    %v493 = vpop.f32.mrf.mxu0
    %v494 = vadd.f32 0.0, %v493
    %495 = vdwg.mxu0
    %v496 = vadd.f32 %v149, %v494
    %v497 = vmul.f32 %v496, 2.0
    %v498 = vsel %vm251, %v497, %v496
    %v499 = vxor.u32 %v498, 2147483648
    %v500 = vmul.f32 %v499, 1.442695
    %v501 = vpow.pop %v500
    %v502 = vadd.f32 %v501, 1.0
    %v503 = vrcp.pop %v502
    %v504 = vmul.f32 %v502, %v503
    %v505 = vsub.f32 1.0, %v504
    %v506 = vmul.f32 %v503, %v505
    %v507 = vadd.f32 %v503, %v506
    %vm508 = vweird.f32 %v502
    %vm509 = vweird.f32 %v503
    %vm510 = vmor %vm508, %vm509
    %v511 = vsel %vm510, %v503, %v507
    %v512 = vand.u32 2147483647, %v502
    %vm513 = vcmp.eq.f32.partialorder %v512, 8.507059e+37
    %v514 = vand.u32 %v502, 2147483648
    %v515 = vor.u32 1.1754944e-38, %v514
    %v516 = vsel %vm513, %v515, %v511
    %v517 = vmul.f32 1.0, %v516
    %v518 = vmul.f32 %v517, 2.0
    %v519 = vsub.f32 %v518, 1.0
    %v520 = vsel %vm251, %v519, %v517
    %v521 = vmul.f32 %v520, %v459
    %523 = vrot.lane.b32.xlu0 %v520, 64
    %v524 = vpop.permute.xlu0 %523
    %v526 = vmul.f32 %v520, %v524
    %528 = vrot.lane.b32.xlu0 %v526, 32
    %v529 = vpop.permute.xlu0 %528
    %v531 = vadd.f32 %v521, %v529
    %v532 = vtanh.pop %v531
    %534 = vrot.lane.b32.xlu0 %v532, 64
    %v535 = vpop.permute.xlu0 %534
    %v537 = vmul.f32 %v520, %v535
    %vm538 = vcmask 1042176
    %539 = vst.msk [vmem:[%s6] sm:$0x3] %vm538, %v537
    %541 = vrot.lane.b32.xlu0 %v537, 32
    %v542 = vpop.permute.xlu0 %541
    %v543 = vsel %vm254, %v542, 0
    %545 = vmatpush.msra.mxu0 0.0
    %546 = vmatpush.msra.mxu0 0.0
    %547 = vmatpush.msra.mxu0 0.0
    %548 = vmatpush.msra.mxu0 0.0
    %549 = vmatpush.msra.mxu0 0.0
    %550 = vmatpush.msra.mxu0 0.0
    %551 = vmatpush.msra.mxu0 0.0
    %552 = vmatpush.msra.mxu0 0.0
    %553 = vmatpush.msra.mxu0 0.0
    %554 = vmatpush.msra.mxu0 0.0
    %555 = vmatpush.msra.mxu0 0.0
    %556 = vmatpush.msra.mxu0 0.0
    %557 = vmatpush.msra.mxu0 %v49
    %558 = vmatpush.msra.mxu0 %v48
    %559 = vmatpush.msra.mxu0 %v47
    %560 = vmatpush.msra.mxu0 %v46
    %561 = vmatmul.f32.gmra.mxu0 %v543
    %v562 = vpop.f32.mrf.mxu0
    %v563 = vadd.f32 0.0, %v562
    %564 = vdwg.mxu0
    %v565 = vadd.f32 %v173, %v563
    %v566 = vmul.f32 %v565, 2.0
    %v567 = vsel %vm251, %v566, %v565
    %v568 = vxor.u32 %v567, 2147483648
    %v569 = vmul.f32 %v568, 1.442695
    %v570 = vpow.pop %v569
    %v571 = vadd.f32 %v570, 1.0
    %v572 = vrcp.pop %v571
    %v573 = vmul.f32 %v571, %v572
    %v574 = vsub.f32 1.0, %v573
    %v575 = vmul.f32 %v572, %v574
    %v576 = vadd.f32 %v572, %v575
    %vm577 = vweird.f32 %v571
    %vm578 = vweird.f32 %v572
    %vm579 = vmor %vm577, %vm578
    %v580 = vsel %vm579, %v572, %v576
    %v581 = vand.u32 2147483647, %v571
    %vm582 = vcmp.eq.f32.partialorder %v581, 8.507059e+37
    %v583 = vand.u32 %v571, 2147483648
    %v584 = vor.u32 1.1754944e-38, %v583
    %v585 = vsel %vm582, %v584, %v580
    %v586 = vmul.f32 1.0, %v585
    %v587 = vmul.f32 %v586, 2.0
    %v588 = vsub.f32 %v587, 1.0
    %v589 = vsel %vm251, %v588, %v586
    %v590 = vmul.f32 %v589, %v531
    %592 = vrot.lane.b32.xlu0 %v589, 64
    %v593 = vpop.permute.xlu0 %592
    %v595 = vmul.f32 %v589, %v593
    %597 = vrot.lane.b32.xlu0 %v595, 32
    %v598 = vpop.permute.xlu0 %597
    %v600 = vadd.f32 %v590, %v598
    %v601 = vtanh.pop %v600
    %603 = vrot.lane.b32.xlu0 %v601, 64
    %v604 = vpop.permute.xlu0 %603
    %v606 = vmul.f32 %v589, %v604
    %608 = vrot.lane.b32.xlu0 %v606, 32
    %v609 = vpop.permute.xlu0 %608
    %611 = vst.msk [vmem:[%s6 + $0x2] sm:$0x3] %vm328, %v609
    %v612 = vsel %vm254, %v609, 0
    %614 = vmatpush.msra.mxu0 0.0
    %615 = vmatpush.msra.mxu0 0.0
    %616 = vmatpush.msra.mxu0 0.0
    %617 = vmatpush.msra.mxu0 0.0
    %618 = vmatpush.msra.mxu0 0.0
    %619 = vmatpush.msra.mxu0 0.0
    %620 = vmatpush.msra.mxu0 0.0
    %621 = vmatpush.msra.mxu0 0.0
    %622 = vmatpush.msra.mxu0 0.0
    %623 = vmatpush.msra.mxu0 0.0
    %624 = vmatpush.msra.mxu0 0.0
    %625 = vmatpush.msra.mxu0 0.0
    %626 = vmatpush.msra.mxu0 %v49
    %627 = vmatpush.msra.mxu0 %v48
    %628 = vmatpush.msra.mxu0 %v47
    %629 = vmatpush.msra.mxu0 %v46
    %630 = vmatmul.f32.gmra.mxu0 %v612
    %v631 = vpop.f32.mrf.mxu0
    %v632 = vadd.f32 0.0, %v631
    %633 = vdwg.mxu0
    %v634 = vadd.f32 %v197, %v632
    %v635 = vmul.f32 %v634, 2.0
    %v636 = vsel %vm251, %v635, %v634
    %v637 = vxor.u32 %v636, 2147483648
    %v638 = vmul.f32 %v637, 1.442695
    %v639 = vpow.pop %v638
    %v640 = vadd.f32 %v639, 1.0
    %v641 = vrcp.pop %v640
    %v642 = vmul.f32 %v640, %v641
    %v643 = vsub.f32 1.0, %v642
    %v644 = vmul.f32 %v641, %v643
    %v645 = vadd.f32 %v641, %v644
    %vm646 = vweird.f32 %v640
    %vm647 = vweird.f32 %v641
    %vm648 = vmor %vm646, %vm647
    %v649 = vsel %vm648, %v641, %v645
    %v650 = vand.u32 2147483647, %v640
    %vm651 = vcmp.eq.f32.partialorder %v650, 8.507059e+37
    %v652 = vand.u32 %v640, 2147483648
    %v653 = vor.u32 1.1754944e-38, %v652
    %v654 = vsel %vm651, %v653, %v649
    %v655 = vmul.f32 1.0, %v654
    %v656 = vmul.f32 %v655, 2.0
    %v657 = vsub.f32 %v656, 1.0
    %v658 = vsel %vm251, %v657, %v655
    %v659 = vmul.f32 %v658, %v600
    %661 = vrot.lane.b32.xlu0 %v658, 64
    %v662 = vpop.permute.xlu0 %661
    %v664 = vmul.f32 %v658, %v662
    %666 = vrot.lane.b32.xlu0 %v664, 32
    %v667 = vpop.permute.xlu0 %666
    %v669 = vadd.f32 %v659, %v667
    %v670 = vtanh.pop %v669
    %672 = vrot.lane.b32.xlu0 %v670, 64
    %v673 = vpop.permute.xlu0 %672
    %v675 = vmul.f32 %v658, %v673
    %677 = vrot.lane.b32.xlu0 %v675, 64
    %v678 = vpop.permute.xlu0 %677
    %680 = vst.msk [vmem:[%s6 + $0x2] sm:$0x3] %vm398, %v678
    %681 = vrot.lane.b32.xlu0 %v675, 32
    %v682 = vpop.permute.xlu0 %681
    %v683 = vsel %vm254, %v682, 0
    %685 = vmatpush.msra.mxu0 0.0
    %686 = vmatpush.msra.mxu0 0.0
    %687 = vmatpush.msra.mxu0 0.0
    %688 = vmatpush.msra.mxu0 0.0
    %689 = vmatpush.msra.mxu0 0.0
    %690 = vmatpush.msra.mxu0 0.0
    %691 = vmatpush.msra.mxu0 0.0
    %692 = vmatpush.msra.mxu0 0.0
    %693 = vmatpush.msra.mxu0 0.0
    %694 = vmatpush.msra.mxu0 0.0
    %695 = vmatpush.msra.mxu0 0.0
    %696 = vmatpush.msra.mxu0 0.0
    %697 = vmatpush.msra.mxu0 %v49
    %698 = vmatpush.msra.mxu0 %v48
    %699 = vmatpush.msra.mxu0 %v47
    %700 = vmatpush.msra.mxu0 %v46
    %701 = vmatmul.f32.gmra.mxu0 %v683
    %v702 = vpop.f32.mrf.mxu0
    %v703 = vadd.f32 0.0, %v702
    %704 = vdwg.mxu0
    %v705 = vadd.f32 %v221, %v703
    %v706 = vmul.f32 %v705, 2.0
    %v707 = vsel %vm251, %v706, %v705
    %v708 = vxor.u32 %v707, 2147483648
    %v709 = vmul.f32 %v708, 1.442695
    %v710 = vpow.pop %v709
    %v711 = vadd.f32 %v710, 1.0
    %v712 = vrcp.pop %v711
    %v713 = vmul.f32 %v711, %v712
    %v714 = vsub.f32 1.0, %v713
    %v715 = vmul.f32 %v712, %v714
    %v716 = vadd.f32 %v712, %v715
    %vm717 = vweird.f32 %v711
    %vm718 = vweird.f32 %v712
    %vm719 = vmor %vm717, %vm718
    %v720 = vsel %vm719, %v712, %v716
    %v721 = vand.u32 2147483647, %v711
    %vm722 = vcmp.eq.f32.partialorder %v721, 8.507059e+37
    %v723 = vand.u32 %v711, 2147483648
    %v724 = vor.u32 1.1754944e-38, %v723
    %v725 = vsel %vm722, %v724, %v720
    %v726 = vmul.f32 1.0, %v725
    %v727 = vmul.f32 %v726, 2.0
    %v728 = vsub.f32 %v727, 1.0
    %v729 = vsel %vm251, %v728, %v726
    %v730 = vmul.f32 %v729, %v669
    %732 = vrot.lane.b32.xlu0 %v729, 64
    %v733 = vpop.permute.xlu0 %732
    %v735 = vmul.f32 %v729, %v733
    %737 = vrot.lane.b32.xlu0 %v735, 32
    %v738 = vpop.permute.xlu0 %737
    %v740 = vadd.f32 %v730, %v738
    %v741 = vtanh.pop %v740
    %743 = vrot.lane.b32.xlu0 %v741, 64
    %v744 = vpop.permute.xlu0 %743
    %v746 = vmul.f32 %v729, %v744
    %748 = vrot.lane.b32.xlu0 %v746, 96
    %v749 = vpop.permute.xlu0 %748
    %751 = vst.msk [vmem:[%s6 + $0x2] sm:$0x3] %vm470, %v749
    %752 = vrot.lane.b32.xlu0 %v746, 32
    %v753 = vpop.permute.xlu0 %752
    %v754 = vsel %vm254, %v753, 0
    %756 = vmatpush.msra.mxu0 0.0
    %757 = vmatpush.msra.mxu0 0.0
    %758 = vmatpush.msra.mxu0 0.0
    %759 = vmatpush.msra.mxu0 0.0
    %760 = vmatpush.msra.mxu0 0.0
    %761 = vmatpush.msra.mxu0 0.0
    %762 = vmatpush.msra.mxu0 0.0
    %763 = vmatpush.msra.mxu0 0.0
    %764 = vmatpush.msra.mxu0 0.0
    %765 = vmatpush.msra.mxu0 0.0
    %766 = vmatpush.msra.mxu0 0.0
    %767 = vmatpush.msra.mxu0 0.0
    %768 = vmatpush.msra.mxu0 %v49
    %769 = vmatpush.msra.mxu0 %v48
    %770 = vmatpush.msra.mxu0 %v47
    %771 = vmatpush.msra.mxu0 %v46
    %772 = vmatmul.f32.gmra.mxu0 %v754
    %v773 = vpop.f32.mrf.mxu0
    %v774 = vadd.f32 0.0, %v773
    %775 = vdwg.mxu0
    %v776 = vadd.f32 %v245, %v774
    %v777 = vmul.f32 %v776, 2.0
    %v778 = vsel %vm251, %v777, %v776
    %v779 = vxor.u32 %v778, 2147483648
    %v780 = vmul.f32 %v779, 1.442695
    %v781 = vpow.pop %v780
    %v782 = vadd.f32 %v781, 1.0
    %v783 = vrcp.pop %v782
    %v784 = vmul.f32 %v782, %v783
    %v785 = vsub.f32 1.0, %v784
    %v786 = vmul.f32 %v783, %v785
    %v787 = vadd.f32 %v783, %v786
    %vm788 = vweird.f32 %v782
    %vm789 = vweird.f32 %v783
    %vm790 = vmor %vm788, %vm789
    %v791 = vsel %vm790, %v783, %v787
    %v792 = vand.u32 2147483647, %v782
    %vm793 = vcmp.eq.f32.partialorder %v792, 8.507059e+37
    %v794 = vand.u32 %v782, 2147483648
    %v795 = vor.u32 1.1754944e-38, %v794
    %v796 = vsel %vm793, %v795, %v791
    %v797 = vmul.f32 1.0, %v796
    %v798 = vmul.f32 %v797, 2.0
    %v799 = vsub.f32 %v798, 1.0
    %v800 = vsel %vm251, %v799, %v797
    %v801 = vmul.f32 %v800, %v740
    %803 = vrot.lane.b32.xlu0 %v800, 64
    %v804 = vpop.permute.xlu0 %803
    %v806 = vmul.f32 %v800, %v804
    %808 = vrot.lane.b32.xlu0 %v806, 32
    %v809 = vpop.permute.xlu0 %808
    %v811 = vadd.f32 %v801, %v809
    %v812 = vtanh.pop %v811
    %814 = vrot.lane.b32.xlu0 %v812, 64
    %v815 = vpop.permute.xlu0 %814
    %v817 = vmul.f32 %v800, %v815
    %818 = vst.msk [vmem:[%s6 + $0x2] sm:$0x3] %vm538, %v817
    %820 = vrot.lane.b32.xlu0 %v817, 32
    %v821 = vpop.permute.xlu0 %820
    %823 = vst.msk [vmem:[#allocation5] sm:$0x3] %vm328, %v821
    %825 = vrot.lane.b32.xlu0 %v811, 96
    %v826 = vpop.permute.xlu0 %825
    %828 = vst.msk [vmem:[#allocation6] sm:$0x3] %vm328, %v826
    // Predicated region
    $region30: #{lstm_forward.1} parent=1 // pred_check
      _
    $region31: #{lstm_forward.1} parent=1 // pred_check_branch
      %830 = sbr.rel (0) target = $region33
    $region32: #{lstm_forward.1} parent=1 // pred_region
      _
    $region33: #{lstm_forward.1} parent=1 // pred_fallthru
      _
    // Predicated region
    $region34: #{lstm_forward.1} parent=1 // pred_check
      _
    $region35: #{lstm_forward.1} parent=1 // pred_check_branch
      %832 = sbr.rel (0) target = $region37
    $region36: #{lstm_forward.1} parent=1 // pred_region
      %834 = vsyncadd [#allocation4], 0
      %s836 = sshll.u32 [#allocation5], 4
      %s837 = int_to_ptr.vmem [resolvable:$true] %s836
      %s838 = sshll.u32 %s7, 4
      %s839 = int_to_ptr.hbm [resolvable:$true] %s838
      %841 = dma.vmem_to_hbm [thread:$0]  %s837, 32, %s839, [#allocation4]
    $region37: #{lstm_forward.1} parent=1 // pred_fallthru
      _
    // Predicated region
    $region38: #{lstm_forward.1} parent=1 // pred_check
      _
    $region39: #{lstm_forward.1} parent=1 // pred_check_branch
      %843 = sbr.rel (0) target = $region41
    $region40: #{lstm_forward.1} parent=1 // pred_region
      %845 = vsyncadd [#allocation7], 0
      %s847 = sshll.u32 [#allocation6], 4
      %s848 = int_to_ptr.vmem [resolvable:$true] %s847
      %s849 = sshll.u32 %s8, 4
      %s850 = int_to_ptr.hbm [resolvable:$true] %s849
      %852 = dma.vmem_to_hbm [thread:$0]  %s848, 32, %s850, [#allocation7]
    $region41: #{lstm_forward.1} parent=1 // pred_fallthru
      _
    // Predicated region
    $region42: #{lstm_forward.1} parent=1 // pred_check
      _
    $region43: #{lstm_forward.1} parent=1 // pred_check_branch
      %854 = sbr.rel (0) target = $region45
    $region44: #{lstm_forward.1} parent=1 // pred_region
      _
    $region45: #{lstm_forward.1} parent=1 // pred_fallthru
      _
    // Predicated region
    $region46: #{lstm_forward.1} parent=1 // pred_check
      _
    $region47: #{lstm_forward.1} parent=1 // pred_check_branch
      %856 = sbr.rel (0) target = $region49
    $region48: #{lstm_forward.1} parent=1 // pred_region
      %858 = dma.done [#allocation4], 32
    $region49: #{lstm_forward.1} parent=1 // pred_fallthru
      _
    // Predicated region
    $region50: #{lstm_forward.1} parent=1 // pred_check
      _
    $region51: #{lstm_forward.1} parent=1 // pred_check_branch
      %860 = sbr.rel (0) target = $region53
    $region52: #{lstm_forward.1} parent=1 // pred_region
      %862 = dma.done [#allocation7], 32
    $region53: #{lstm_forward.1} parent=1 // pred_fallthru
      _
    %863 = vsyncpa [#allocation3], 1
    %864 = vsyncpa [#allocation4], 1
    %865 = vsyncpa [#allocation7], 1

</llo_original>
